<compile_context>
chip_gen: v6e
topology: v6e:2x2x1
jax: 0.10.0
libtpu: 0.0.40
codegen_flags: <defaults>
</compile_context>

<pallas_src>
import functools

import jax
import jax.numpy as jnp
import numpy as np
from jax.experimental import pallas as pl
from jax.experimental.pallas import tpu as pltpu


# --------------------------------------------------------------------------
# Kernels
# --------------------------------------------------------------------------
def _stats_kernel(x_ref, new_scale_ref, new_bias_ref, logdet_ref,
                  sum_ref, sq_ref, *, inv_m, hw):
    """Accumulate per-channel, per-lane partial sums; finalize on last tile."""
    first = jnp.logical_and(pl.program_id(0) == 0, pl.program_id(1) == 0)
    last = jnp.logical_and(pl.program_id(0) == pl.num_programs(0) - 1,
                           pl.program_id(1) == pl.num_programs(1) - 1)

    @pl.when(first)
    def _():
        sum_ref[...] = jnp.zeros_like(sum_ref)
        sq_ref[...] = jnp.zeros_like(sq_ref)

    xf = x_ref[...].astype(jnp.float32)          # (C, THW), f32 accumulation
    sum_ref[...] += xf
    sq_ref[...] += xf * xf

    @pl.when(last)
    def _():
        mean = jnp.sum(sum_ref[...], axis=1, keepdims=True) * inv_m   # (C, 1)
        ex2 = jnp.sum(sq_ref[...], axis=1, keepdims=True) * inv_m
        var = jnp.maximum(ex2 - mean * mean, 0.0)
        std = jnp.sqrt(var) + 1e-6               # torch .std(1, False) + 1e-6
        new_scale_ref[...] = std
        new_bias_ref[...] = mean
        logdet_ref[...] = -jnp.sum(jnp.log(jnp.abs(std)), keepdims=True) * hw


def _normalize_kernel(x_ref, scale_ref, bias_ref, z_ref):
    """z = (x - bias) / scale, per-channel broadcast over the lane axis."""
    xf = x_ref[...].astype(jnp.float32)                      # (C, THW)
    inv_scale = pl.reciprocal(scale_ref[...], approx=False)  # (C, 1)
    z_ref[...] = ((xf - bias_ref[...]) * inv_scale).astype(z_ref.dtype)


def _logdet_kernel(scale_ref, logdet_ref, *, hw):
    logdet_ref[...] = -jnp.sum(jnp.log(jnp.abs(scale_ref[...])), keepdims=True) * hw


# --------------------------------------------------------------------------
# Wrapper
# --------------------------------------------------------------------------
def _pick_hw_tile(hw, c):
    """Largest multiple-of-128 tile along HW that divides HW and keeps the
    double-buffered in+out f32 tiles comfortably under ~8 MiB."""
    budget_lanes = max(128, (2 * 1024 * 1024) // max(c, 1))
    target = min(2048, budget_lanes)
    target = (target // 128) * 128
    if hw <= max(target, 128):
        return hw
    for cand in range(target, 0, -128):
        if hw % cand == 0:
            return cand
    # TODO(synk): HW has no multiple-of-128 divisor <= target; fall back to a
    # single (full) block along HW instead of masked partial tiles.
    return hw


def actnorm_forward(x, scale, bias, initialized):
    """ActNorm forward.

    x: (N, C, H, W); scale/bias: (1, C, 1, 1); initialized: static Python int/bool
    (mirrors the PyTorch host-side `if not self.initialized` branch).
    Returns (z, logdet, new_scale, new_bias).
    """
    N, C, H, W = x.shape
    HW = H * W
    M = N * HW

    x3d = x.reshape(N, C, HW)                       # free reshape, no transpose
    scale2d = scale.reshape(C, 1).astype(jnp.float32)
    bias2d = bias.reshape(C, 1).astype(jnp.float32)

    thw = _pick_hw_tile(HW, C)
    num_t = HW // thw

    cparams_par = pltpu.CompilerParams(
        dimension_semantics=("parallel", "parallel"),
        vmem_limit_bytes=32 * 1024 * 1024)
    cparams_red = pltpu.CompilerParams(
        dimension_semantics=("arbitrary", "arbitrary"),
        vmem_limit_bytes=32 * 1024 * 1024)

    x_spec = pl.BlockSpec((pl.Squeezed(), C, thw), lambda n, t: (n, 0, t))
    vec_spec = pl.BlockSpec((C, 1), lambda n, t: (0, 0))
    sc_spec = pl.BlockSpec((1, 1), lambda n, t: (0, 0))

    if not initialized:
        # One streaming pass over x: data-dependent init stats + logdet.
        new_scale2d, new_bias2d, logdet = pl.pallas_call(
            functools.partial(_stats_kernel, inv_m=1.0 / M, hw=float(HW)),
            out_shape=(
                jax.ShapeDtypeStruct((C, 1), jnp.float32),
                jax.ShapeDtypeStruct((C, 1), jnp.float32),
                jax.ShapeDtypeStruct((1, 1), jnp.float32),
            ),
            grid=(N, num_t),
            in_specs=[x_spec],
            out_specs=(vec_spec, vec_spec, sc_spec),
            scratch_shapes=[pltpu.VMEM((C, thw), jnp.float32),
                            pltpu.VMEM((C, thw), jnp.float32)],
            compiler_params=cparams_red,
        )(x3d)
        scale_use, bias_use = new_scale2d, new_bias2d
    else:
        scale_use, bias_use = scale2d, bias2d
        logdet = pl.pallas_call(
            functools.partial(_logdet_kernel, hw=float(HW)),
            out_shape=jax.ShapeDtypeStruct((1, 1), jnp.float32),
            in_specs=[pl.BlockSpec(memory_space=pltpu.MemorySpace.VMEM)],
            out_specs=pl.BlockSpec(memory_space=pltpu.MemorySpace.VMEM),
        )(scale2d)

    # Steady-state normalize: tiled, auto-pipelined, megacore-parallel.
    z3d = pl.pallas_call(
        _normalize_kernel,
        out_shape=jax.ShapeDtypeStruct((N, C, HW), x.dtype),
        grid=(N, num_t),
        in_specs=[x_spec, vec_spec, vec_spec],
        out_specs=x_spec,
        compiler_params=cparams_par,
    )(x3d, scale_use, bias_use)

    z = z3d.reshape(N, C, H, W)
    return (z, logdet[0, 0],
            scale_use.reshape(1, C, 1, 1), bias_use.reshape(1, C, 1, 1))


# --------------------------------------------------------------------------
# Pure-JAX reference mirroring the PyTorch forward.
# --------------------------------------------------------------------------
def _actnorm_reference(x, scale, bias, initialized):
    N, C, H, W = x.shape
    flat = jnp.transpose(x, (1, 0, 2, 3)).reshape(C, -1)
    mean = flat.mean(axis=1)
    std = jnp.sqrt(((flat - mean[:, None]) ** 2).mean(axis=1)) + 1e-6
    if not initialized:
        bias = mean.reshape(1, C, 1, 1)
        scale = std.reshape(1, C, 1, 1)
    z = (x - bias) / scale
    logdet = -jnp.sum(jnp.log(jnp.abs(scale))) * H * W
    return z, logdet


if __name__ == "__main__":
    key = jax.random.PRNGKey(0)
    N, C, H, W = 2, 4, 16, 16

    x = jax.random.normal(key, (N, C, H, W), dtype=jnp.float32) * 2.0 + 0.5

    # Deterministic parameter init, as in ActNorm.__init__ with param_dim=(1, C, 1, 1)
    scale = jnp.ones((1, C, 1, 1), dtype=jnp.float32)
    bias = jnp.zeros((1, C, 1, 1), dtype=jnp.float32)
    initialized = 0  # fresh module: the forward performs data-dependent init

    z, logdet, new_scale, new_bias = actnorm_forward(x, scale, bias, initialized)
    jax.block_until_ready((z, logdet, new_scale, new_bias))

    z_ref, logdet_ref = _actnorm_reference(x, scale, bias, initialized)
    np.testing.assert_allclose(np.asarray(z), np.asarray(z_ref), rtol=1e-5, atol=1e-5)
    np.testing.assert_allclose(np.asarray(logdet), np.asarray(logdet_ref), rtol=1e-5, atol=1e-5)

    # Second call path (already "initialized"): uses the stored params.
    z2, logdet2, _, _ = actnorm_forward(x, new_scale, new_bias, 1)
    jax.block_until_ready((z2, logdet2))
    np.testing.assert_allclose(np.asarray(z2), np.asarray(z_ref), rtol=1e-5, atol=1e-5)
    np.testing.assert_allclose(np.asarray(logdet2), np.asarray(logdet_ref), rtol=1e-5, atol=1e-5)

    print("KERNEL_OK")
</pallas_src>

<mosaic_0001>
module attributes {stable_mosaic.version = 11 : i64} {
  func.func @_stats_kernel(%arg0: i32, %arg1: i32, %arg2: memref<1x4x256xf32, #tpu.memory_space<vmem>>, %arg3: memref<4x1xf32, #tpu.memory_space<vmem>>, %arg4: memref<4x1xf32, #tpu.memory_space<vmem>>, %arg5: memref<1x1xf32, #tpu.memory_space<vmem>>, %arg6: memref<4x256xf32, #tpu.memory_space<vmem>>, %arg7: memref<4x256xf32, #tpu.memory_space<vmem>>) attributes {dimension_semantics = [#tpu.dimension_semantics<arbitrary>, #tpu.dimension_semantics<arbitrary>], iteration_bounds = array<i64: 2, 1>, scalar_prefetch = 0 : i64, scratch_operands = 2 : i64, tpu.core_type = #tpu.core_type<tc>, window_params = [{transform_indices = @transform_0, window_bounds = array<i64: 1, 4, 256>}, {pipeline_mode = #tpu.pipeline_mode<synchronous>, transform_indices = @transform_1, window_bounds = array<i64: 4, 1>}, {pipeline_mode = #tpu.pipeline_mode<synchronous>, transform_indices = @transform_2, window_bounds = array<i64: 4, 1>}, {pipeline_mode = #tpu.pipeline_mode<synchronous>, transform_indices = @transform_3, window_bounds = array<i64: 1, 1>}]} {
    %c0_i32 = arith.constant 0 : i32
    %0 = arith.cmpi eq, %arg0, %c0_i32 : i32
    %c0_i32_0 = arith.constant 0 : i32
    %1 = arith.cmpi eq, %arg1, %c0_i32_0 : i32
    %2 = arith.andi %0, %1 : i1
    %c1_i32 = arith.constant 1 : i32
    %3 = arith.cmpi eq, %arg0, %c1_i32 : i32
    %c0_i32_1 = arith.constant 0 : i32
    %4 = arith.cmpi eq, %arg1, %c0_i32_1 : i32
    %5 = arith.andi %3, %4 : i1
    %6 = arith.extui %2 : i1 to i32
    %c0_i32_2 = arith.constant 0 : i32
    %7 = arith.cmpi ne, %6, %c0_i32_2 : i32
    scf.if %7 {
      %cst = arith.constant 0.000000e+00 : f32
      %19 = vector.broadcast %cst : f32 to vector<4x256xf32>
      %c0_14 = arith.constant 0 : index
      %c0_15 = arith.constant 0 : index
      %20 = vector.load %arg6[%c0_14, %c0_15] : memref<4x256xf32, #tpu.memory_space<vmem>>, vector<4x256xf32>
      tpu.vector_store %arg6[%c0_14, %c0_15], %19 {strides = array<i32>} : memref<4x256xf32, #tpu.memory_space<vmem>>, vector<4x256xf32>,
      %cst_16 = arith.constant 0.000000e+00 : f32
      %21 = vector.broadcast %cst_16 : f32 to vector<4x256xf32>
      %c0_17 = arith.constant 0 : index
      %c0_18 = arith.constant 0 : index
      %22 = vector.load %arg7[%c0_17, %c0_18] : memref<4x256xf32, #tpu.memory_space<vmem>>, vector<4x256xf32>
      tpu.vector_store %arg7[%c0_17, %c0_18], %21 {strides = array<i32>} : memref<4x256xf32, #tpu.memory_space<vmem>>, vector<4x256xf32>,
    } else {
    }
    %c0 = arith.constant 0 : index
    %c0_3 = arith.constant 0 : index
    %c0_4 = arith.constant 0 : index
    %8 = vector.load %arg2[%c0, %c0_3, %c0_4] : memref<1x4x256xf32, #tpu.memory_space<vmem>>, vector<1x4x256xf32>
    %9 = vector.shape_cast %8 : vector<1x4x256xf32> to vector<4x256xf32>
    %c0_5 = arith.constant 0 : index
    %c0_6 = arith.constant 0 : index
    %10 = vector.load %arg6[%c0_5, %c0_6] : memref<4x256xf32, #tpu.memory_space<vmem>>, vector<4x256xf32>
    %11 = arith.addf %10, %9 : vector<4x256xf32>
    %c0_7 = arith.constant 0 : index
    %c0_8 = arith.constant 0 : index
    %12 = vector.load %arg6[%c0_7, %c0_8] : memref<4x256xf32, #tpu.memory_space<vmem>>, vector<4x256xf32>
    tpu.vector_store %arg6[%c0_7, %c0_8], %11 {strides = array<i32>} : memref<4x256xf32, #tpu.memory_space<vmem>>, vector<4x256xf32>,
    %c0_9 = arith.constant 0 : index
    %c0_10 = arith.constant 0 : index
    %13 = vector.load %arg7[%c0_9, %c0_10] : memref<4x256xf32, #tpu.memory_space<vmem>>, vector<4x256xf32>
    %14 = arith.mulf %9, %9 : vector<4x256xf32>
    %15 = arith.addf %13, %14 : vector<4x256xf32>
    %c0_11 = arith.constant 0 : index
    %c0_12 = arith.constant 0 : index
    %16 = vector.load %arg7[%c0_11, %c0_12] : memref<4x256xf32, #tpu.memory_space<vmem>>, vector<4x256xf32>
    tpu.vector_store %arg7[%c0_11, %c0_12], %15 {strides = array<i32>} : memref<4x256xf32, #tpu.memory_space<vmem>>, vector<4x256xf32>,
    %17 = arith.extui %5 : i1 to i32
    %c0_i32_13 = arith.constant 0 : i32
    %18 = arith.cmpi ne, %17, %c0_i32_13 : i32
    scf.if %18 {
      %c0_14 = arith.constant 0 : index
      %c0_15 = arith.constant 0 : index
      %19 = vector.load %arg6[%c0_14, %c0_15] : memref<4x256xf32, #tpu.memory_space<vmem>>, vector<4x256xf32>
      %cst = arith.constant dense<0.000000e+00> : vector<4xf32>
      %20 = vector.multi_reduction <add>, %19, %cst [1] : vector<4x256xf32> to vector<4xf32>
      %21 = vector.shape_cast %20 : vector<4xf32> to vector<4x1xf32>
      %cst_16 = arith.constant 0.001953125 : f32
      %22 = vector.broadcast %cst_16 : f32 to vector<4x1xf32>
      %23 = arith.mulf %21, %22 : vector<4x1xf32>
      %c0_17 = arith.constant 0 : index
      %c0_18 = arith.constant 0 : index
      %24 = vector.load %arg7[%c0_17, %c0_18] : memref<4x256xf32, #tpu.memory_space<vmem>>, vector<4x256xf32>
      %cst_19 = arith.constant dense<0.000000e+00> : vector<4xf32>
      %25 = vector.multi_reduction <add>, %24, %cst_19 [1] : vector<4x256xf32> to vector<4xf32>
      %26 = vector.shape_cast %25 : vector<4xf32> to vector<4x1xf32>
      %cst_20 = arith.constant 0.001953125 : f32
      %27 = vector.broadcast %cst_20 : f32 to vector<4x1xf32>
      %28 = arith.mulf %26, %27 : vector<4x1xf32>
      %29 = arith.mulf %23, %23 : vector<4x1xf32>
      %30 = arith.subf %28, %29 : vector<4x1xf32>
      %cst_21 = arith.constant 0.000000e+00 : f32
      %31 = vector.broadcast %cst_21 : f32 to vector<4x1xf32>
      %32 = arith.maximumf %30, %31 : vector<4x1xf32>
      %33 = math.sqrt %32 : vector<4x1xf32>
      %cst_22 = arith.constant 9.99999997E-7 : f32
      %34 = vector.broadcast %cst_22 : f32 to vector<4x1xf32>
      %35 = arith.addf %33, %34 : vector<4x1xf32>
      %c0_23 = arith.constant 0 : index
      %c0_24 = arith.constant 0 : index
      %36 = vector.load %arg3[%c0_23, %c0_24] : memref<4x1xf32, #tpu.memory_space<vmem>>, vector<4x1xf32>
      tpu.vector_store %arg3[%c0_23, %c0_24], %35 {strides = array<i32>} : memref<4x1xf32, #tpu.memory_space<vmem>>, vector<4x1xf32>,
      %c0_25 = arith.constant 0 : index
      %c0_26 = arith.constant 0 : index
      %37 = vector.load %arg4[%c0_25, %c0_26] : memref<4x1xf32, #tpu.memory_space<vmem>>, vector<4x1xf32>
      tpu.vector_store %arg4[%c0_25, %c0_26], %23 {strides = array<i32>} : memref<4x1xf32, #tpu.memory_space<vmem>>, vector<4x1xf32>,
      %38 = math.absf %35 : vector<4x1xf32>
      %39 = math.log %38 : vector<4x1xf32>
      %40 = vector.shape_cast %39 : vector<4x1xf32> to vector<1x4x1xf32>
      %cst_27 = arith.constant dense<0.000000e+00> : vector<1xf32>
      %41 = vector.multi_reduction <add>, %40, %cst_27 [1, 2] : vector<1x4x1xf32> to vector<1xf32>
      %42 = vector.shape_cast %41 : vector<1xf32> to vector<1x1x1xf32>
      %43 = vector.extract %42[0, 0, 0] : f32 from vector<1x1x1xf32>
      %44 = vector.broadcast %43 : f32 to vector<1x1xf32>
      %cst_28 = arith.constant 0.000000e+00 : f32
      %45 = vector.broadcast %cst_28 : f32 to vector<1x1xf32>
      %46 = arith.subf %45, %44 : vector<1x1xf32>
      %cst_29 = arith.constant 2.560000e+02 : f32
      %47 = vector.broadcast %cst_29 : f32 to vector<1x1xf32>
      %48 = arith.mulf %46, %47 : vector<1x1xf32>
      %c0_30 = arith.constant 0 : index
      %c0_31 = arith.constant 0 : index
      %49 = vector.load %arg5[%c0_30, %c0_31] : memref<1x1xf32, #tpu.memory_space<vmem>>, vector<1x1xf32>
      tpu.vector_store %arg5[%c0_30, %c0_31], %48 {strides = array<i32>} : memref<1x1xf32, #tpu.memory_space<vmem>>, vector<1x1xf32>,
    } else {
    }
    return
  }
  func.func @transform_0(%arg0: i32, %arg1: i32) -> (i32, i32, i32) {
    %c0_i32 = arith.constant 0 : i32
    %c0_i32_0 = arith.constant 0 : i32
    return %arg0, %c0_i32, %arg1 : i32, i32, i32
  }
  func.func @transform_1(%arg0: i32, %arg1: i32) -> (i32, i32) {
    %c0_i32 = arith.constant 0 : i32
    %c0_i32_0 = arith.constant 0 : i32
    %c0_i32_1 = arith.constant 0 : i32
    return %c0_i32, %c0_i32_0 : i32, i32
  }
  func.func @transform_2(%arg0: i32, %arg1: i32) -> (i32, i32) {
    %c0_i32 = arith.constant 0 : i32
    %c0_i32_0 = arith.constant 0 : i32
    %c0_i32_1 = arith.constant 0 : i32
    return %c0_i32, %c0_i32_0 : i32, i32
  }
  func.func @transform_3(%arg0: i32, %arg1: i32) -> (i32, i32) {
    %c0_i32 = arith.constant 0 : i32
    %c0_i32_0 = arith.constant 0 : i32
    %c0_i32_1 = arith.constant 0 : i32
    return %c0_i32, %c0_i32_0 : i32, i32
  }
}

</mosaic_0001>

<llo_original>
// kernel: tpu_custom_call.1
$region0: #{tpu_custom_call.1}
  #allocation0 [shape = 'u32[]', space=smem, size = 0x4, offset = 0x4, fixed_abs, tag = 'smem constant byte address 0x4 - core index']
  #allocation1 [shape = 'u32[144,128]{1,0:T(1,128)}', space=vmem, size = 0x12000, scoped, tag = 'internal scratch']
  #allocation2 [shape = 'f32[4,256]{1,0:T(4,128)}', space=vmem, size = 0x1000, scoped, tag = 'scratch operand']
  #allocation3 [shape = 'f32[4,256]{1,0:T(4,128)}', space=vmem, size = 0x1000, scoped, tag = 'scratch operand']
  %s0 = inlined_call_operand.hbm [shape: f32[2,4,256], index: 0, kind: input, shape index: {}]
  %s1 = inlined_call_operand.vmem [shape: f32[4,1], index: 1, kind: output, shape index: {0}]
  %s2 = inlined_call_operand.vmem [shape: f32[4,1], index: 2, kind: output, shape index: {1}]
  %s3 = inlined_call_operand.hbm [shape: f32[1,1], index: 3, kind: output, shape index: {2}]
  %4 = xla_tuple %s1, %s2, %s3
  %s5 = sld [smem:[#allocation0]]
  $region65: #{tpu_custom_call.1} parent=0
    _
  %s7 = ssub.s32 1, %s5
  %s8 = scalar_select 0, %s7, %s5
  $region1: #{tpu_custom_call.1} parent=0
    #allocation4 [shape = 'u8[8192]{0}', space=vmem, size = 0x2000, scoped, tag = 'input window, operand 0']
    #allocation5 [shape = 's32[2]{0}', space=sflag, size = 0x8, scoped, tag = 'scoped memory for tpu_custom_call.1']
    #allocation6 [shape = 's32[2]{0}', space=sflag, size = 0x8, scoped, tag = 'scoped memory for tpu_custom_call.1']
    #allocation7 [shape = 'u8[512]{0}', space=vmem, size = 0x400, scoped, tag = 'output window, operand 2, single buffered']
    %9 = vsyncpa [#allocation5], 0
    %s10 = scalar_lea.sflag [#allocation5], 1
    %11 = vsyncpa %s10, 0
    %12 = vsyncpa [#allocation6], 0
    loop: start=0, step=1, limit=4
    $region2: #{tpu_custom_call.1} parent=1 // loop_pre_header
      _
    $region3: #{tpu_custom_call.1} parent=1 // loop_header
      %s14 = sphi 0, %s18
      %p15 = scmp.ge.s32.totalorder %s14, 4
      %s21 = sphi 0, %s33
      %s22 = sphi 0, %s29
      %s23 = sphi 0, %s21
      %s24 = sphi 0, %s22
      %s25 = sphi 0, %s23
      %s26 = sphi 0, %s24
      %s38 = sphi 0, %s40
      %s41 = sphi 0, %s38
      %s42 = sphi 0, %s41
      %s58 = sphi 0, %s42
      %s62 = sphi 0, %s62
      %s64 = sphi 0, %s62
      %s65 = sphi 0, %s64
      %s79 = sphi 0, %s65
      %s83 = sphi 0, %s83
      %s85 = sphi 0, %s83
      %s86 = sphi 0, %s85
      %s100 = sphi 0, %s86
      %s104 = sphi 0, %s104
      %s106 = sphi 0, %s104
      %s107 = sphi 0, %s106
      %s121 = sphi 0, %s107
    $region4: #{tpu_custom_call.1} parent=1 // loop_header_branch
      %17 = sbr.rel (%p15) target = $region8
    $region5: #{tpu_custom_call.1} parent=1 // loop_body
      %s19 = ssub.s32 %s14, 1
      %s20 = ssub.s32 %s14, 2
      %s27 = sadd.s32 1, %s22
      %p28 = scmp.ge.s32.totalorder %s27, 1
      %s29 = scalar_select %p28, 0, %s27
      %s30 = sadd.s32 1, %s21
      %s31 = scalar_select %p28, %s30, %s21
      %p32 = scmp.ge.s32.totalorder %s31, 2
      %s33 = scalar_select %p32, 0, %s31
      %s34 = ssub.s32 %s21, %s33
      %s35 = ssub.s32 %s22, %s29
      %s36 = sor.u32 %s34, %s35
      %p37 = scmp.eq.s32.totalorder %s36, 0
      %s39 = sadd.s32 %s38, 1
      %s40 = scalar_select %p37, %s38, %s39
      %p43 = pneg %p37
      %p44 = scmp.eq.s32.totalorder %s14, 1
      %p45 = por %p43, %p44
      %p46 = scmp.ne.s32.totalorder %s38, %s41
      %p47 = scmp.eq.s32.totalorder %s14, 0
      %p48 = por %p46, %p47
      %p49 = scmp.ne.s32.totalorder %s38, %s41
      %p50 = scmp.eq.s32.totalorder %s19, 1
      %p51 = por %p49, %p50
      %p52 = scmp.ne.s32.totalorder %s41, %s42
      %p53 = scmp.eq.s32.totalorder %s19, 0
      %p54 = por %p52, %p53
      %p55 = scmp.ne.s32.totalorder %s41, %s42
      %p56 = scmp.eq.s32.totalorder %s20, 1
      %p57 = por %p55, %p56
      %p59 = scmp.ne.s32.totalorder %s42, %s58
      %p60 = scmp.eq.s32.totalorder %s20, 0
      %p61 = por %p59, %p60
      %s63 = sadd.s32 %s62, 1
      %p66 = scmp.eq.s32.totalorder %s14, 1
      %p67 = scmp.ne.s32.totalorder %s62, %s64
      %p68 = scmp.eq.s32.totalorder %s14, 0
      %p69 = por %p67, %p68
      %p70 = scmp.ne.s32.totalorder %s62, %s64
      %p71 = scmp.eq.s32.totalorder %s19, 1
      %p72 = por %p70, %p71
      %p73 = scmp.ne.s32.totalorder %s64, %s65
      %p74 = scmp.eq.s32.totalorder %s19, 0
      %p75 = por %p73, %p74
      %p76 = scmp.ne.s32.totalorder %s64, %s65
      %p77 = scmp.eq.s32.totalorder %s20, 1
      %p78 = por %p76, %p77
      %p80 = scmp.ne.s32.totalorder %s65, %s79
      %p81 = scmp.eq.s32.totalorder %s20, 0
      %p82 = por %p80, %p81
      %s84 = sadd.s32 %s83, 1
      %p87 = scmp.eq.s32.totalorder %s14, 1
      %p88 = scmp.ne.s32.totalorder %s83, %s85
      %p89 = scmp.eq.s32.totalorder %s14, 0
      %p90 = por %p88, %p89
      %p91 = scmp.ne.s32.totalorder %s83, %s85
      %p92 = scmp.eq.s32.totalorder %s19, 1
      %p93 = por %p91, %p92
      %p94 = scmp.ne.s32.totalorder %s85, %s86
      %p95 = scmp.eq.s32.totalorder %s19, 0
      %p96 = por %p94, %p95
      %p97 = scmp.ne.s32.totalorder %s85, %s86
      %p98 = scmp.eq.s32.totalorder %s20, 1
      %p99 = por %p97, %p98
      %p101 = scmp.ne.s32.totalorder %s86, %s100
      %p102 = scmp.eq.s32.totalorder %s20, 0
      %p103 = por %p101, %p102
      %s105 = sadd.s32 %s104, 1
      %p108 = scmp.eq.s32.totalorder %s14, 1
      %p109 = scmp.ne.s32.totalorder %s104, %s106
      %p110 = scmp.eq.s32.totalorder %s14, 0
      %p111 = por %p109, %p110
      %p112 = scmp.ne.s32.totalorder %s104, %s106
      %p113 = scmp.eq.s32.totalorder %s19, 1
      %p114 = por %p112, %p113
      %p115 = scmp.ne.s32.totalorder %s106, %s107
      %p116 = scmp.eq.s32.totalorder %s19, 0
      %p117 = por %p115, %p116
      %p118 = scmp.ne.s32.totalorder %s106, %s107
      %p119 = scmp.eq.s32.totalorder %s20, 1
      %p120 = por %p118, %p119
      %p122 = scmp.ne.s32.totalorder %s107, %s121
      %p123 = scmp.eq.s32.totalorder %s20, 0
      %p124 = por %p122, %p123
      %p125 = scmp.le.s32.totalorder 1, %s14
      %p126 = scmp.lt.s32.totalorder %s14, 3
      %p127 = pnand %p125, %p126
      %p128 = pneg %p127
      // Predicated region
      $region9: #{tpu_custom_call.1} parent=5 // pred_check
        _
      $region10: #{tpu_custom_call.1} parent=5 // pred_check_branch
        %130 = sbr.rel (%p127) target = $region12
      $region11: #{tpu_custom_call.1} parent=5 // pred_region
        %s131 = ssub.s32 %s14, 1
      $region12: #{tpu_custom_call.1} parent=5 // pred_fallthru
        _
      %p132 = scmp.lt.s32.totalorder %s14, 2
      // Predicated region
      $region13: #{tpu_custom_call.1} parent=5 // pred_check
        %p133 = pneg %p132
      $region14: #{tpu_custom_call.1} parent=5 // pred_check_branch
        %135 = sbr.rel (%p133) target = $region16
      $region15: #{tpu_custom_call.1} parent=5 // pred_region
        // Predicated region
        $region17: #{tpu_custom_call.1} parent=15 // pred_check
          %p136 = pneg %p48
        $region18: #{tpu_custom_call.1} parent=15 // pred_check_branch
          %138 = sbr.rel (%p136) target = $region20
        $region19: #{tpu_custom_call.1} parent=15 // pred_region
          %s139 = sand.u32 %s38, 1
          %s140 = scalar_lea.sflag [#allocation5], %s139
          %s141 = sand.u32 %s38, 1
          %s142 = smul.addr %s141, 8
          %s143 = scalar_lea.vmem [#allocation4], %s142
          %s144 = smul.u32 2, %s22
          %s146 = ssub.s32 128, 128
          %147 = vsyncadd %s140, %s146
          %s148 = smul.addr %s21, 2
          %s149 = sadd.s32 %s144, %s148
          %s150 = smul.addr %s149, 64
          %s151 = scalar_lea.hbm %s0, %s150
          %s153 = sshll.u32 %s143, 4
          %s154 = int_to_ptr.vmem [resolvable:$true] %s153
          %156 = dma.hbm_to_vmem [thread:$0]  %s151, 128, %s154, %s140
        $region20: #{tpu_custom_call.1} parent=15 // pred_fallthru
          _
      $region16: #{tpu_custom_call.1} parent=5 // pred_fallthru
        _
      %p157 = scmp.le.s32.totalorder 1, %s14
      %p158 = scmp.lt.s32.totalorder %s14, 3
      %p159 = pnand %p157, %p158
      %p160 = pneg %p159
      // Predicated region
      $region21: #{tpu_custom_call.1} parent=5 // pred_check
        _
      $region22: #{tpu_custom_call.1} parent=5 // pred_check_branch
        %162 = sbr.rel (%p159) target = $region24
      $region23: #{tpu_custom_call.1} parent=5 // pred_region
        %s163 = ssub.s32 %s14, 1
        %s164 = sand.u32 %s41, 1
        %s165 = scalar_lea.sflag [#allocation5], %s164
        %s166 = sand.u32 %s41, 1
        %s167 = smul.addr %s166, 8
        %s168 = scalar_lea.vmem [#allocation4], %s167
        // Predicated region
        $region25: #{tpu_custom_call.1} parent=23 // pred_check
          %p169 = pneg %p54
        $region26: #{tpu_custom_call.1} parent=23 // pred_check_branch
          %171 = sbr.rel (%p169) target = $region28
        $region27: #{tpu_custom_call.1} parent=23 // pred_region
          %172 = dma.done %s165, 128
        $region28: #{tpu_custom_call.1} parent=23 // pred_fallthru
          _
        %s173 = sand.u32 %s41, 1
        %s174 = scalar_lea.sflag [#allocation5], %s173
        %s175 = sand.u32 %s41, 1
        %s176 = smul.addr %s175, 8
        %s177 = scalar_lea.vmem [#allocation4], %s176
        %p178 = pneg %p54
        %p179 = pneg %p51
        %p180 = pneg %p75
        %p181 = pneg %p72
        %p182 = pneg %p96
        %p183 = pneg %p93
        %p184 = pneg %p117
        %p185 = pneg %p114
        %s186 = smul.u32 2, %s24
        %p187 = scmp.eq.s32.totalorder %s23, 0
        %p188 = scmp.eq.s32.totalorder %s24, 0
        %p189 = pnand %p187, %p188
        %p190 = pneg %p189
        %p191 = scmp.eq.s32.totalorder %s23, 1
        %p192 = pnand %p191, %p188
        %p193 = pneg %p192
        // Predicated region
        $region29: #{tpu_custom_call.1} parent=23 // pred_check
          _
        $region30: #{tpu_custom_call.1} parent=23 // pred_check_branch
          %195 = sbr.rel (%p189) target = $region32
        $region31: #{tpu_custom_call.1} parent=23 // pred_region
          %196 = vst [vmem:[#allocation2] sm:$0xff] 0.0
          %197 = vst [vmem:[#allocation3] sm:$0xff] 0.0
        $region32: #{tpu_custom_call.1} parent=23 // pred_fallthru
          _
        %v198 = vld [vmem:[%s168] sm:$0xff]
        %v199 = vld [vmem:[#allocation2] sm:$0xff]
        %v200 = vadd.f32 %v199, %v198
        %201 = vst [vmem:[#allocation2] sm:$0xff] %v200
        %v202 = vld [vmem:[#allocation3] sm:$0xff]
        %v203 = vmul.f32 %v198, %v198
        %v204 = vadd.f32 %v202, %v203
        %205 = vst [vmem:[#allocation3] sm:$0xff] %v204
        // Predicated region
        $region33: #{tpu_custom_call.1} parent=23 // pred_check
          _
        $region34: #{tpu_custom_call.1} parent=23 // pred_check_branch
          %207 = sbr.rel (%p192) target = $region36
        $region35: #{tpu_custom_call.1} parent=23 // pred_region
          %v208 = vld [vmem:[#allocation2] sm:$0xff]
          %v210 = vcombine.high %v208, %v208
          %vm212 = vcmask 1043456
          %v213 = vsel %vm212, %v208, 0.0
          %v214 = vsel %vm212, %v210, 0.0
          %v215 = vadd.f32 %v213, %v214
          %216 = vadd.xlane.f32.xlu0 %v215
          %v217 = vpop.xlane.xlu0 %216
          %v218 = vmul.f32 %v217, 0.001953125
          %v219 = vld [vmem:[#allocation3] sm:$0xff]
          %v221 = vcombine.high %v219, %v219
          %v223 = vsel %vm212, %v219, 0.0
          %v224 = vsel %vm212, %v221, 0.0
          %v225 = vadd.f32 %v223, %v224
          %226 = vadd.xlane.f32.xlu0 %v225
          %v227 = vpop.xlane.xlu0 %226
          %v228 = vmul.f32 %v227, 0.001953125
          %v229 = vmul.f32 %v218, %v218
          %v230 = vsub.f32 %v228, %v229
          %v231 = vmax.f32 %v230, 0.0
          %v232 = vrsqrt.pop %v231
          %v233 = vmul.f32 %v231, %v232
          %vm234 = vcmp.eq.f32.partialorder %v231, inf
          %v235 = vsel %vm234, %v231, %v233
          %vm236 = vcmp.eq.f32.partialorder %v231, 0.0
          %v237 = vand.u32 %v231, 2147483648
          %v238 = vsel %vm236, %v237, %v235
          %v239 = vadd.f32 %v238, 1e-06
          %vm240 = vcmask 3072
          %241 = vst.msk [vmem:[%s1] sm:$0xf] %vm240, %v239
          %242 = vst.msk [vmem:[%s2] sm:$0xf] %vm240, %v218
          %v243 = vand.u32 2147483647, %v239
          %v244 = vlog2.pop %v243
          %v245 = vmul.f32 %v244, 0.6931472
          %v246 = vsel %vm240, %v245, 0.0
          %247 = vadd.xlane.f32.xlu0 %v246
          %v248 = vpop.xlane.xlu0 %247
          %v249 = vrot.slane %v248, 4
          %v250 = vadd.f32 %v248, %v249
          %v251 = vrot.slane %v250, 2
          %v252 = vadd.f32 %v250, %v251
          %v253 = vrot.slane %v252, 1
          %v254 = vadd.f32 %v252, %v253
          %s255 = vtos %v254
          %v256 = vstv %s255
          %v257 = vsub.f32 0.0, %v256
          %v258 = vmul.f32 %v257, 256.0
          %vm259 = vcmask 0
          %260 = vst.msk [vmem:[#allocation7] sm:$0x1] %vm259, %v258
        $region36: #{tpu_custom_call.1} parent=23 // pred_fallthru
          _
        // Predicated region
        $region37: #{tpu_custom_call.1} parent=23 // pred_check
          %p261 = pneg %p72
        $region38: #{tpu_custom_call.1} parent=23 // pred_check_branch
          %263 = sbr.rel (%p261) target = $region40
        $region39: #{tpu_custom_call.1} parent=23 // pred_region
          _
        $region40: #{tpu_custom_call.1} parent=23 // pred_fallthru
          _
        // Predicated region
        $region41: #{tpu_custom_call.1} parent=23 // pred_check
          %p264 = pneg %p93
        $region42: #{tpu_custom_call.1} parent=23 // pred_check_branch
          %266 = sbr.rel (%p264) target = $region44
        $region43: #{tpu_custom_call.1} parent=23 // pred_region
          _
        $region44: #{tpu_custom_call.1} parent=23 // pred_fallthru
          _
        // Predicated region
        $region45: #{tpu_custom_call.1} parent=23 // pred_check
          %p267 = pneg %p114
        $region46: #{tpu_custom_call.1} parent=23 // pred_check_branch
          %269 = sbr.rel (%p267) target = $region48
        $region47: #{tpu_custom_call.1} parent=23 // pred_region
          %s271 = ssub.s32 16, 16
          %272 = vsyncadd [#allocation6], %s271
          %s274 = sshll.u32 [#allocation7], 4
          %s275 = int_to_ptr.vmem [resolvable:$true] %s274
          %277 = dma.vmem_to_hbm [thread:$0]  %s275, 16, %s3, [#allocation6]
        $region48: #{tpu_custom_call.1} parent=23 // pred_fallthru
          _
        // Predicated region
        $region49: #{tpu_custom_call.1} parent=23 // pred_check
          %p278 = pneg %p72
        $region50: #{tpu_custom_call.1} parent=23 // pred_check_branch
          %280 = sbr.rel (%p278) target = $region52
        $region51: #{tpu_custom_call.1} parent=23 // pred_region
          _
        $region52: #{tpu_custom_call.1} parent=23 // pred_fallthru
          _
        // Predicated region
        $region53: #{tpu_custom_call.1} parent=23 // pred_check
          %p281 = pneg %p93
        $region54: #{tpu_custom_call.1} parent=23 // pred_check_branch
          %283 = sbr.rel (%p281) target = $region56
        $region55: #{tpu_custom_call.1} parent=23 // pred_region
          _
        $region56: #{tpu_custom_call.1} parent=23 // pred_fallthru
          _
        // Predicated region
        $region57: #{tpu_custom_call.1} parent=23 // pred_check
          %p284 = pneg %p114
        $region58: #{tpu_custom_call.1} parent=23 // pred_check_branch
          %286 = sbr.rel (%p284) target = $region60
        $region59: #{tpu_custom_call.1} parent=23 // pred_region
          %287 = dma.done [#allocation6], 16
        $region60: #{tpu_custom_call.1} parent=23 // pred_fallthru
          _
      $region24: #{tpu_custom_call.1} parent=5 // pred_fallthru
        _
      %p288 = scmp.le.s32.totalorder 2, %s14
      // Predicated region
      $region61: #{tpu_custom_call.1} parent=5 // pred_check
        %p289 = pneg %p288
      $region62: #{tpu_custom_call.1} parent=5 // pred_check_branch
        %291 = sbr.rel (%p289) target = $region64
      $region63: #{tpu_custom_call.1} parent=5 // pred_region
        %s292 = ssub.s32 %s14, 2
      $region64: #{tpu_custom_call.1} parent=5 // pred_fallthru
        _
    $region6: #{tpu_custom_call.1} parent=1 // loop_footer
      %s18 = sadd.s32 1, %s14
    $region7: #{tpu_custom_call.1} parent=1 // loop_footer_branch
      %13 = sbr.rel target = $region3
    $region8: #{tpu_custom_call.1} parent=1 // loop_exit
      _
    %293 = vsyncpa [#allocation5], 1
    %s294 = scalar_lea.sflag [#allocation5], 1
    %295 = vsyncpa %s294, 1
    %296 = vsyncpa [#allocation6], 1
    %s297 = scalar_lea.sflag [#allocation6], 1
    %298 = vsyncpa %s297, 1

</llo_original>
